<compile_context>
chip_gen: v7x
topology: tpu7x:2x2x1
jax: 0.10.0
libtpu: 0.0.40
codegen_flags: <defaults>
</compile_context>

<pallas_src>
from functools import partial

import jax
import jax.numpy as jnp
from jax.experimental import pallas as pl
from jax.experimental.pallas import tpu as pltpu


def _module_periodic_kernel(time_ref, genre_ref, tw_ref, b_ref, out_ref, *, P, G, V_pad):
    tb = out_ref.shape[1]

    # Fused integer prologue (matches the PyTorch elementwise ops), batch on lanes.
    pt = time_ref[...] % P                                   # (1, tb)  int32
    genre = genre_ref[...]                                   # (G, tb)  int32
    joint = (genre * P + pt) * jnp.minimum(genre, 1)         # (G, tb)  int32

    # counts[v, b] = #{g : joint[g, b] == v}; accumulate in int32, cast once.
    iota_v = jax.lax.broadcasted_iota(jnp.int32, (V_pad, tb), 0)
    counts = jnp.zeros((V_pad, tb), dtype=jnp.int32)
    for g in range(G):                                       # G small & static -> unrolled
        counts = counts + (iota_v == joint[g:g + 1, :]).astype(jnp.int32)

    # mean_g tw[joint[g,b]] == sum_v counts[v,b] * tw[v]   (1/G already folded into tw)
    vals = counts.astype(jnp.float32) * tw_ref[...]          # (V_pad, tb) * (V_pad, 1)
    s = jnp.sum(vals, axis=0, keepdims=True)                 # (1, tb)  sublane reduce (XLU)

    out_ref[...] = jnp.maximum(s + b_ref[0], 0.0)            # bias from SMEM scalar, ReLU


def module_periodic_forward(time, item_genre, embed_table, fc_w, fc_b, num_genre_period):
    """JAX/Pallas equivalent of ModulePeriodic.forward.

    time:        (B,)   int32
    item_genre:  (B, G) int32 genre ids (0 = padding)
    embed_table: (V, E) f32, V = num_genre_period * num_genres, row 0 zeros
    fc_w:        (E, 1) f32   (PyTorch Linear weight transposed)
    fc_b:        (1, 1) f32
    returns:     (B, 1) f32
    """
    B, G = item_genre.shape
    V, E = embed_table.shape
    P = int(num_genre_period)

    # Fold embedding table @ fc weight (and the 1/G of the mean) into a (V, 1) vector.
    tw = (embed_table.astype(jnp.float32) @ fc_w.astype(jnp.float32)) * (1.0 / G)  # (V, 1)
    V_pad = ((V + 7) // 8) * 8
    if V_pad != V:
        tw = jnp.pad(tw, ((0, V_pad - V), (0, 0)))           # padded rows are zero

    time_row = time.astype(jnp.int32).reshape(1, B)          # batch on lanes
    genre_t = item_genre.astype(jnp.int32).T                 # (G, B), batch on lanes
    bias = fc_b.reshape(1).astype(jnp.float32)               # SMEM scalar

    # Tile the batch (lane) axis; at large B use 256-wide lane tiles, else one block.
    tb = B if (B < 256 or B % 128 != 0) else 256
    grid = (pl.cdiv(B, tb),)

    out = pl.pallas_call(
        partial(_module_periodic_kernel, P=P, G=G, V_pad=V_pad),
        out_shape=jax.ShapeDtypeStruct((1, B), jnp.float32),
        grid=grid,
        in_specs=[
            pl.BlockSpec((1, tb), lambda i: (0, i)),                       # time
            pl.BlockSpec((G, tb), lambda i: (0, i)),                       # item_genre^T
            pl.BlockSpec((V_pad, 1), lambda i: (0, 0)),                    # tw (resident)
            pl.BlockSpec(memory_space=pltpu.MemorySpace.SMEM),             # bias scalar
        ],
        out_specs=pl.BlockSpec((1, tb), lambda i: (0, i)),                 # lane-dense out
        compiler_params=pltpu.CompilerParams(dimension_semantics=("parallel",)),
    )(time_row, genre_t, tw, bias)

    return out.reshape(B, 1)


def _reference(time, item_genre, embed_table, fc_w, fc_b, num_genre_period):
    B, G = item_genre.shape
    period_time = (time % num_genre_period).astype(jnp.int32)
    period_time = jnp.broadcast_to(period_time[:, None], (B, G))
    period_time_pad = jnp.minimum(item_genre, 1)             # torch.clamp(max=1)
    joint_id = (item_genre * num_genre_period + period_time) * period_time_pad
    joint_embed = jnp.take(embed_table, joint_id, axis=0).mean(axis=1)     # (B, E)
    return jnp.maximum(joint_embed @ fc_w + fc_b, 0.0)


if __name__ == "__main__":
    # Small synthetic config: num_genre_period=4, num_side_info[0]=8 genres, embed_size=32
    num_genre_period = 4
    num_genres = 8
    embed_size = 32
    V = num_genre_period * num_genres                        # 32 embedding rows
    B, G = 8, 8                                              # batch, genres-per-item

    key = jax.random.PRNGKey(0)
    k_tab, k_w, k_b, k_time, k_genre = jax.random.split(key, 5)

    # Deterministic params (padding_idx=0 -> zero row 0, as nn.Embedding does).
    embed_table = 0.1 * jax.random.normal(k_tab, (V, embed_size), dtype=jnp.float32)
    embed_table = embed_table.at[0].set(0.0)
    fc_w = 0.1 * jax.random.normal(k_w, (embed_size, 1), dtype=jnp.float32)
    fc_b = 0.1 * jax.random.normal(k_b, (1, 1), dtype=jnp.float32)

    # Deterministic example inputs.
    time = jax.random.randint(k_time, (B,), 0, 100, dtype=jnp.int32)
    item_genre = jax.random.randint(k_genre, (B, G), 0, num_genres, dtype=jnp.int32)

    out = module_periodic_forward(time, item_genre, embed_table, fc_w, fc_b,
                                  num_genre_period)
    out = jax.block_until_ready(out)

    ref = _reference(time, item_genre, embed_table, fc_w, fc_b, num_genre_period)
    assert out.shape == (B, 1)
    assert jnp.allclose(out, ref, atol=1e-5, rtol=1e-4), (out, ref)

    print("KERNEL_OK")
</pallas_src>

<mosaic_0001>
module attributes {stable_mosaic.version = 11 : i64} {
  func.func @_module_periodic_kernel(%arg0: i32, %arg1: memref<1x8xi32, #tpu.memory_space<vmem>>, %arg2: memref<8x8xi32, #tpu.memory_space<vmem>>, %arg3: memref<32x1xf32, #tpu.memory_space<vmem>>, %arg4: memref<1xf32, #tpu.memory_space<smem>>, %arg5: memref<1x8xf32, #tpu.memory_space<vmem>>) attributes {dimension_semantics = [#tpu.dimension_semantics<parallel>], iteration_bounds = array<i64: 1>, scalar_prefetch = 0 : i64, scratch_operands = 0 : i64, tpu.core_type = #tpu.core_type<tc>, window_params = [{transform_indices = @transform_0, window_bounds = array<i64: 1, 8>}, {transform_indices = @transform_1, window_bounds = array<i64: 8, 8>}, {pipeline_mode = #tpu.pipeline_mode<synchronous>, transform_indices = @transform_2, window_bounds = array<i64: 32, 1>}, {transform_indices = @transform_3, window_bounds = array<i64: 1>}, {transform_indices = @transform_4, window_bounds = array<i64: 1, 8>}]} {
    %c0 = arith.constant 0 : index
    %c0_0 = arith.constant 0 : index
    %0 = vector.load %arg1[%c0, %c0_0] : memref<1x8xi32, #tpu.memory_space<vmem>>, vector<1x8xi32>
    %c4_i32 = arith.constant 4 : i32
    %c0_i32 = arith.constant 0 : i32
    %1 = arith.cmpi eq, %c4_i32, %c0_i32 : i32
    %c1_i32 = arith.constant 1 : i32
    %2 = arith.select %1, %c1_i32, %c4_i32 : i32
    %3 = vector.broadcast %2 : i32 to vector<1x8xi32>
    %4 = arith.remsi %0, %3 : vector<1x8xi32>
    %c0_i32_1 = arith.constant 0 : i32
    %5 = vector.broadcast %c0_i32_1 : i32 to vector<1x8xi32>
    %6 = arith.cmpi ne, %4, %5 : vector<1x8xi32>
    %c0_i32_2 = arith.constant 0 : i32
    %7 = vector.broadcast %c0_i32_2 : i32 to vector<1x8xi32>
    %8 = arith.cmpi slt, %4, %7 : vector<1x8xi32>
    %c0_i32_3 = arith.constant 0 : i32
    %9 = arith.cmpi slt, %2, %c0_i32_3 : i32
    %10 = vector.broadcast %9 : i1 to vector<1x8xi1>
    %11 = vector.broadcast %10 : vector<1x8xi1> to vector<1x8xi1>
    %12 = arith.xori %8, %11 : vector<1x8xi1>
    %13 = arith.andi %12, %6 : vector<1x8xi1>
    %14 = vector.broadcast %2 : i32 to vector<1x8xi32>
    %15 = arith.addi %4, %14 : vector<1x8xi32>
    %16 = arith.select %13, %15, %4 : vector<1x8xi1>, vector<1x8xi32>
    %c0_4 = arith.constant 0 : index
    %c0_5 = arith.constant 0 : index
    %17 = vector.load %arg2[%c0_4, %c0_5] : memref<8x8xi32, #tpu.memory_space<vmem>>, vector<8x8xi32>
    %c4_i32_6 = arith.constant 4 : i32
    %18 = vector.broadcast %c4_i32_6 : i32 to vector<8x8xi32>
    %19 = arith.muli %17, %18 : vector<8x8xi32>
    %20 = vector.broadcast %16 : vector<1x8xi32> to vector<8x8xi32>
    %21 = arith.addi %19, %20 : vector<8x8xi32>
    %c1_i32_7 = arith.constant 1 : i32
    %22 = vector.broadcast %c1_i32_7 : i32 to vector<8x8xi32>
    %23 = arith.minsi %17, %22 : vector<8x8xi32>
    %24 = arith.muli %21, %23 : vector<8x8xi32>
    %25 = tpu.iota {dimensions = array<i32: 0>} : vector<32x8xi32>
    %c0_i32_8 = arith.constant 0 : i32
    %26 = vector.broadcast %c0_i32_8 : i32 to vector<32x8xi32>
    %27 = vector.extract_strided_slice %24 {offsets = [0, 0], sizes = [1, 8], strides = [1, 1]} : vector<8x8xi32> to vector<1x8xi32>
    %28 = vector.broadcast %27 : vector<1x8xi32> to vector<32x8xi32>
    %29 = arith.cmpi eq, %25, %28 : vector<32x8xi32>
    %30 = arith.extui %29 : vector<32x8xi1> to vector<32x8xi32>
    %31 = arith.addi %26, %30 : vector<32x8xi32>
    %32 = vector.extract_strided_slice %24 {offsets = [1, 0], sizes = [1, 8], strides = [1, 1]} : vector<8x8xi32> to vector<1x8xi32>
    %33 = vector.broadcast %32 : vector<1x8xi32> to vector<32x8xi32>
    %34 = arith.cmpi eq, %25, %33 : vector<32x8xi32>
    %35 = arith.extui %34 : vector<32x8xi1> to vector<32x8xi32>
    %36 = arith.addi %31, %35 : vector<32x8xi32>
    %37 = vector.extract_strided_slice %24 {offsets = [2, 0], sizes = [1, 8], strides = [1, 1]} : vector<8x8xi32> to vector<1x8xi32>
    %38 = vector.broadcast %37 : vector<1x8xi32> to vector<32x8xi32>
    %39 = arith.cmpi eq, %25, %38 : vector<32x8xi32>
    %40 = arith.extui %39 : vector<32x8xi1> to vector<32x8xi32>
    %41 = arith.addi %36, %40 : vector<32x8xi32>
    %42 = vector.extract_strided_slice %24 {offsets = [3, 0], sizes = [1, 8], strides = [1, 1]} : vector<8x8xi32> to vector<1x8xi32>
    %43 = vector.broadcast %42 : vector<1x8xi32> to vector<32x8xi32>
    %44 = arith.cmpi eq, %25, %43 : vector<32x8xi32>
    %45 = arith.extui %44 : vector<32x8xi1> to vector<32x8xi32>
    %46 = arith.addi %41, %45 : vector<32x8xi32>
    %47 = vector.extract_strided_slice %24 {offsets = [4, 0], sizes = [1, 8], strides = [1, 1]} : vector<8x8xi32> to vector<1x8xi32>
    %48 = vector.broadcast %47 : vector<1x8xi32> to vector<32x8xi32>
    %49 = arith.cmpi eq, %25, %48 : vector<32x8xi32>
    %50 = arith.extui %49 : vector<32x8xi1> to vector<32x8xi32>
    %51 = arith.addi %46, %50 : vector<32x8xi32>
    %52 = vector.extract_strided_slice %24 {offsets = [5, 0], sizes = [1, 8], strides = [1, 1]} : vector<8x8xi32> to vector<1x8xi32>
    %53 = vector.broadcast %52 : vector<1x8xi32> to vector<32x8xi32>
    %54 = arith.cmpi eq, %25, %53 : vector<32x8xi32>
    %55 = arith.extui %54 : vector<32x8xi1> to vector<32x8xi32>
    %56 = arith.addi %51, %55 : vector<32x8xi32>
    %57 = vector.extract_strided_slice %24 {offsets = [6, 0], sizes = [1, 8], strides = [1, 1]} : vector<8x8xi32> to vector<1x8xi32>
    %58 = vector.broadcast %57 : vector<1x8xi32> to vector<32x8xi32>
    %59 = arith.cmpi eq, %25, %58 : vector<32x8xi32>
    %60 = arith.extui %59 : vector<32x8xi1> to vector<32x8xi32>
    %61 = arith.addi %56, %60 : vector<32x8xi32>
    %62 = vector.extract_strided_slice %24 {offsets = [7, 0], sizes = [1, 8], strides = [1, 1]} : vector<8x8xi32> to vector<1x8xi32>
    %63 = vector.broadcast %62 : vector<1x8xi32> to vector<32x8xi32>
    %64 = arith.cmpi eq, %25, %63 : vector<32x8xi32>
    %65 = arith.extui %64 : vector<32x8xi1> to vector<32x8xi32>
    %66 = arith.addi %61, %65 : vector<32x8xi32>
    %67 = arith.sitofp %66 : vector<32x8xi32> to vector<32x8xf32>
    %c0_9 = arith.constant 0 : index
    %c0_10 = arith.constant 0 : index
    %68 = vector.load %arg3[%c0_9, %c0_10] : memref<32x1xf32, #tpu.memory_space<vmem>>, vector<32x1xf32>
    %69 = vector.broadcast %68 : vector<32x1xf32> to vector<32x8xf32>
    %70 = arith.mulf %67, %69 : vector<32x8xf32>
    %cst = arith.constant dense<0.000000e+00> : vector<8xf32>
    %71 = vector.multi_reduction <add>, %70, %cst [0] : vector<32x8xf32> to vector<8xf32>
    %72 = vector.shape_cast %71 : vector<8xf32> to vector<1x8xf32>
    %c0_11 = arith.constant 0 : index
    %73 = memref.load %arg4[%c0_11] : memref<1xf32, #tpu.memory_space<smem>>
    %74 = vector.broadcast %73 : f32 to vector<1x8xf32>
    %75 = arith.addf %72, %74 : vector<1x8xf32>
    %cst_12 = arith.constant 0.000000e+00 : f32
    %76 = vector.broadcast %cst_12 : f32 to vector<1x8xf32>
    %77 = arith.maximumf %75, %76 : vector<1x8xf32>
    %c0_13 = arith.constant 0 : index
    %c0_14 = arith.constant 0 : index
    %78 = vector.load %arg5[%c0_13, %c0_14] : memref<1x8xf32, #tpu.memory_space<vmem>>, vector<1x8xf32>
    tpu.vector_store %arg5[%c0_13, %c0_14], %77 {strides = array<i32>} : memref<1x8xf32, #tpu.memory_space<vmem>>, vector<1x8xf32>,
    return
  }
  func.func @transform_0(%arg0: i32) -> (i32, i32) {
    %c0_i32 = arith.constant 0 : i32
    %c0_i32_0 = arith.constant 0 : i32
    return %c0_i32, %arg0 : i32, i32
  }
  func.func @transform_1(%arg0: i32) -> (i32, i32) {
    %c0_i32 = arith.constant 0 : i32
    %c0_i32_0 = arith.constant 0 : i32
    return %c0_i32, %arg0 : i32, i32
  }
  func.func @transform_2(%arg0: i32) -> (i32, i32) {
    %c0_i32 = arith.constant 0 : i32
    %c0_i32_0 = arith.constant 0 : i32
    %c0_i32_1 = arith.constant 0 : i32
    return %c0_i32, %c0_i32_0 : i32, i32
  }
  func.func @transform_3(%arg0: i32) -> i32 {
    %c0_i32 = arith.constant 0 : i32
    %c0_i32_0 = arith.constant 0 : i32
    return %c0_i32 : i32
  }
  func.func @transform_4(%arg0: i32) -> (i32, i32) {
    %c0_i32 = arith.constant 0 : i32
    %c0_i32_0 = arith.constant 0 : i32
    return %c0_i32, %arg0 : i32, i32
  }
}

</mosaic_0001>

<llo_original>
// kernel: tpu_custom_call.1
$region0: #{tpu_custom_call.1}
  #allocation0 [shape = 'u32[]', space=smem, size = 0x4, offset = 0x4, fixed_abs, tag = 'smem constant byte address 0x4 - core index']
  #allocation1 [shape = 'u32[144,128]{1,0:T(1,128)}', space=vmem, size = 0x12000, scoped, tag = 'internal scratch']
  #allocation2 [shape = 'f32[1]{0:T(128)S(6)}', space=smem, size = 0x200, scoped, tag = 'scoped memory for tpu_custom_call.1']
  %s0 = inlined_call_operand.vmem [shape: s32[1,8], index: 0, kind: input, shape index: {}]
  %s1 = inlined_call_operand.vmem [shape: s32[8,8], index: 1, kind: input, shape index: {}]
  %s2 = inlined_call_operand.vmem [shape: f32[32,1], index: 2, kind: input, shape index: {}]
  %s3 = inlined_call_operand.<no memory space> [shape: f32[1], index: 3, kind: input, shape index: {}]
  %s4 = inlined_call_operand.hbm [shape: f32[1,8], index: 4, kind: output, shape index: {}]
  %s5 = sld [smem:[#allocation0]]
  $region26: #{tpu_custom_call.1} parent=0
    _
  %s7 = ssub.s32 1, %s5
  %s8 = scalar_select 0, %s7, %s5
  %9 = sst [smem:[#allocation2]] %s3
  $region1: #{tpu_custom_call.1} parent=0
    #allocation3 [shape = 'u8[512]{0}', space=vmem, size = 0x400, scoped, tag = 'output window, operand 0, single buffered']
    #allocation4 [shape = 's32[1]{0}', space=sflag, size = 0x4, scoped, tag = 'scoped memory for tpu_custom_call.1']
    %10 = vsyncpa [#allocation4], 0
    // Predicated region
    $region2: #{tpu_custom_call.1} parent=1 // pred_check
      _
    $region3: #{tpu_custom_call.1} parent=1 // pred_check_branch
      %12 = sbr.rel (0) target = $region5
    $region4: #{tpu_custom_call.1} parent=1 // pred_region
      _
    $region5: #{tpu_custom_call.1} parent=1 // pred_fallthru
      _
    // Predicated region
    $region6: #{tpu_custom_call.1} parent=1 // pred_check
      _
    $region7: #{tpu_custom_call.1} parent=1 // pred_check_branch
      %14 = sbr.rel (0) target = $region9
    $region8: #{tpu_custom_call.1} parent=1 // pred_region
      _
    $region9: #{tpu_custom_call.1} parent=1 // pred_fallthru
      _
    // Predicated region
    $region10: #{tpu_custom_call.1} parent=1 // pred_check
      _
    $region11: #{tpu_custom_call.1} parent=1 // pred_check_branch
      %16 = sbr.rel (0) target = $region13
    $region12: #{tpu_custom_call.1} parent=1 // pred_region
      _
    $region13: #{tpu_custom_call.1} parent=1 // pred_fallthru
      _
    // Predicated region
    $region14: #{tpu_custom_call.1} parent=1 // pred_check
      _
    $region15: #{tpu_custom_call.1} parent=1 // pred_check_branch
      %18 = sbr.rel (0) target = $region17
    $region16: #{tpu_custom_call.1} parent=1 // pred_region
      _
    $region17: #{tpu_custom_call.1} parent=1 // pred_fallthru
      _
    %v19 = vld [vmem:[%s0] sm:$0x1]
    %vm20 = vcmp.lt.s32.totalorder %v19, 0
    %v21 = vsub.s32 0, %v19
    %v22 = vsel %vm20, %v21, %v19
    %v23 = vshrl.u32 %v22, 2
    %v24 = vand.u32 %v22, 3
    %v25 = vsub.s32 0, %v24
    %v26 = vsel %vm20, %v25, %v24
    %vm27 = vcmp.ne.s32.totalorder %v26, 0
    %vm28 = vcmp.lt.s32.totalorder %v26, 0
    %vm29 = vmand %vm28, %vm27
    %v30 = vadd.s32 %v26, 4
    %v31 = vsel %vm29, %v30, %v26
    %v32 = vld [vmem:[%s1] sm:$0xff]
    %v33 = vmul.u32 %v32, 4
    %v34 = vlaneseq
    %v35 = vshrl.u32 %v34, 7
    %v36 = vsub.s32 0, %v35
    %v37 = vrot.slane %v31, %v36
    %v38 = vadd.s32 %v33, %v37
    %vm39 = vcmp.lt.s32.totalorder %v32, 1
    %v40 = vsel %vm39, %v32, 1
    %v41 = vmul.u32 %v38, %v40
    %v42 = vlaneseq
    %v43 = vshrl.u32 %v42, 7
    %v44 = vadd.s32 %v43, 8
    %v45 = vadd.s32 %v43, 16
    %v46 = vadd.s32 %v43, 24
    %v47 = vlaneseq
    %v48 = vshrl.u32 %v47, 7
    %v49 = vsub.s32 0, %v48
    %v50 = vrot.slane %v41, %v49
    %vm51 = vcmp.eq.s32.totalorder %v43, %v50
    %vm52 = vcmp.eq.s32.totalorder %v44, %v50
    %vm53 = vcmp.eq.s32.totalorder %v45, %v50
    %vm54 = vcmp.eq.s32.totalorder %v46, %v50
    %v55 = vsel %vm51, 1, 0
    %v56 = vsel %vm52, 1, 0
    %v57 = vsel %vm53, 1, 0
    %v58 = vsel %vm54, 1, 0
    %v59 = vlaneseq
    %v60 = vshrl.u32 %v59, 7
    %v61 = vsub.s32 1, %v60
    %v62 = vrot.slane %v41, %v61
    %vm63 = vcmp.eq.s32.totalorder %v43, %v62
    %vm64 = vcmp.eq.s32.totalorder %v44, %v62
    %vm65 = vcmp.eq.s32.totalorder %v45, %v62
    %vm66 = vcmp.eq.s32.totalorder %v46, %v62
    %v67 = vsel %vm63, 1, 0
    %v68 = vsel %vm64, 1, 0
    %v69 = vsel %vm65, 1, 0
    %v70 = vsel %vm66, 1, 0
    %v71 = vadd.s32 %v55, %v67
    %v72 = vadd.s32 %v56, %v68
    %v73 = vadd.s32 %v57, %v69
    %v74 = vadd.s32 %v58, %v70
    %v75 = vlaneseq
    %v76 = vshrl.u32 %v75, 7
    %v77 = vsub.s32 2, %v76
    %v78 = vrot.slane %v41, %v77
    %vm79 = vcmp.eq.s32.totalorder %v43, %v78
    %vm80 = vcmp.eq.s32.totalorder %v44, %v78
    %vm81 = vcmp.eq.s32.totalorder %v45, %v78
    %vm82 = vcmp.eq.s32.totalorder %v46, %v78
    %v83 = vsel %vm79, 1, 0
    %v84 = vsel %vm80, 1, 0
    %v85 = vsel %vm81, 1, 0
    %v86 = vsel %vm82, 1, 0
    %v87 = vadd.s32 %v71, %v83
    %v88 = vadd.s32 %v72, %v84
    %v89 = vadd.s32 %v73, %v85
    %v90 = vadd.s32 %v74, %v86
    %v91 = vlaneseq
    %v92 = vshrl.u32 %v91, 7
    %v93 = vsub.s32 3, %v92
    %v94 = vrot.slane %v41, %v93
    %vm95 = vcmp.eq.s32.totalorder %v43, %v94
    %vm96 = vcmp.eq.s32.totalorder %v44, %v94
    %vm97 = vcmp.eq.s32.totalorder %v45, %v94
    %vm98 = vcmp.eq.s32.totalorder %v46, %v94
    %v99 = vsel %vm95, 1, 0
    %v100 = vsel %vm96, 1, 0
    %v101 = vsel %vm97, 1, 0
    %v102 = vsel %vm98, 1, 0
    %v103 = vadd.s32 %v87, %v99
    %v104 = vadd.s32 %v88, %v100
    %v105 = vadd.s32 %v89, %v101
    %v106 = vadd.s32 %v90, %v102
    %v107 = vlaneseq
    %v108 = vshrl.u32 %v107, 7
    %v109 = vsub.s32 4, %v108
    %v110 = vrot.slane %v41, %v109
    %vm111 = vcmp.eq.s32.totalorder %v43, %v110
    %vm112 = vcmp.eq.s32.totalorder %v44, %v110
    %vm113 = vcmp.eq.s32.totalorder %v45, %v110
    %vm114 = vcmp.eq.s32.totalorder %v46, %v110
    %v115 = vsel %vm111, 1, 0
    %v116 = vsel %vm112, 1, 0
    %v117 = vsel %vm113, 1, 0
    %v118 = vsel %vm114, 1, 0
    %v119 = vadd.s32 %v103, %v115
    %v120 = vadd.s32 %v104, %v116
    %v121 = vadd.s32 %v105, %v117
    %v122 = vadd.s32 %v106, %v118
    %v123 = vlaneseq
    %v124 = vshrl.u32 %v123, 7
    %v125 = vsub.s32 5, %v124
    %v126 = vrot.slane %v41, %v125
    %vm127 = vcmp.eq.s32.totalorder %v43, %v126
    %vm128 = vcmp.eq.s32.totalorder %v44, %v126
    %vm129 = vcmp.eq.s32.totalorder %v45, %v126
    %vm130 = vcmp.eq.s32.totalorder %v46, %v126
    %v131 = vsel %vm127, 1, 0
    %v132 = vsel %vm128, 1, 0
    %v133 = vsel %vm129, 1, 0
    %v134 = vsel %vm130, 1, 0
    %v135 = vadd.s32 %v119, %v131
    %v136 = vadd.s32 %v120, %v132
    %v137 = vadd.s32 %v121, %v133
    %v138 = vadd.s32 %v122, %v134
    %v139 = vlaneseq
    %v140 = vshrl.u32 %v139, 7
    %v141 = vsub.s32 6, %v140
    %v142 = vrot.slane %v41, %v141
    %vm143 = vcmp.eq.s32.totalorder %v43, %v142
    %vm144 = vcmp.eq.s32.totalorder %v44, %v142
    %vm145 = vcmp.eq.s32.totalorder %v45, %v142
    %vm146 = vcmp.eq.s32.totalorder %v46, %v142
    %v147 = vsel %vm143, 1, 0
    %v148 = vsel %vm144, 1, 0
    %v149 = vsel %vm145, 1, 0
    %v150 = vsel %vm146, 1, 0
    %v151 = vadd.s32 %v135, %v147
    %v152 = vadd.s32 %v136, %v148
    %v153 = vadd.s32 %v137, %v149
    %v154 = vadd.s32 %v138, %v150
    %v155 = vlaneseq
    %v156 = vshrl.u32 %v155, 7
    %v157 = vsub.s32 7, %v156
    %v158 = vrot.slane %v41, %v157
    %vm159 = vcmp.eq.s32.totalorder %v43, %v158
    %vm160 = vcmp.eq.s32.totalorder %v44, %v158
    %vm161 = vcmp.eq.s32.totalorder %v45, %v158
    %vm162 = vcmp.eq.s32.totalorder %v46, %v158
    %v163 = vsel %vm159, 1, 0
    %v164 = vsel %vm160, 1, 0
    %v165 = vsel %vm161, 1, 0
    %v166 = vsel %vm162, 1, 0
    %v167 = vadd.s32 %v151, %v163
    %v168 = vadd.s32 %v152, %v164
    %v169 = vadd.s32 %v153, %v165
    %v170 = vadd.s32 %v154, %v166
    %v171 = vcvt.s32.f32 %v167
    %v172 = vcvt.s32.f32 %v168
    %v173 = vcvt.s32.f32 %v169
    %v174 = vcvt.s32.f32 %v170
    %v175 = vld [vmem:[%s2] sm:$0xff]
    %v176 = vld [vmem:[%s2 + $0x8] sm:$0xff]
    %v177 = vld [vmem:[%s2 + $0x10] sm:$0xff]
    %v178 = vld [vmem:[%s2 + $0x18] sm:$0xff]
    %180 = vset.pattern.permute.xlu0 0
    %181 = vperm.xlu0 %180, %v175
    %v182 = vpop.permute.xlu0 %181
    %185 = vset.pattern.permute.xlu0 0
    %186 = vperm.xlu0 %185, %v176
    %v187 = vpop.permute.xlu0 %186
    %190 = vset.pattern.permute.xlu0 0
    %191 = vperm.xlu0 %190, %v177
    %v192 = vpop.permute.xlu0 %191
    %195 = vset.pattern.permute.xlu0 0
    %196 = vperm.xlu0 %195, %v178
    %v197 = vpop.permute.xlu0 %196
    %v199 = vmul.f32 %v171, %v182
    %v200 = vmul.f32 %v172, %v187
    %v201 = vmul.f32 %v173, %v192
    %v202 = vmul.f32 %v174, %v197
    %vm203 = vcmask 64512
    %v204 = vsel %vm203, %v199, 0.0
    %v205 = vsel %vm203, %v200, 0.0
    %v206 = vadd.f32 %v204, %v205
    %v207 = vsel %vm203, %v201, 0.0
    %v208 = vadd.f32 %v206, %v207
    %v209 = vsel %vm203, %v202, 0.0
    %v210 = vadd.f32 %v208, %v209
    %v211 = vrot.slane %v210, 4
    %v212 = vadd.f32 %v210, %v211
    %v213 = vrot.slane %v212, 2
    %v214 = vadd.f32 %v212, %v213
    %v215 = vrot.slane %v214, 1
    %v216 = vadd.f32 %v214, %v215
    %s217 = sld [smem:[#allocation2]]
    %v218 = vstv %s217
    %v219 = vadd.f32 %v216, %v218
    %v220 = vmax.f32 %v219, 0.0
    %vm221 = vcmask 57344
    %222 = vst.msk [vmem:[#allocation3] sm:$0x1] %vm221, %v220
    // Predicated region
    $region18: #{tpu_custom_call.1} parent=1 // pred_check
      _
    $region19: #{tpu_custom_call.1} parent=1 // pred_check_branch
      %224 = sbr.rel (0) target = $region21
    $region20: #{tpu_custom_call.1} parent=1 // pred_region
      %s226 = ssub.s32 16, 16
      %227 = vsyncadd [#allocation4], %s226
      %s229 = sshll.u32 [#allocation3], 4
      %s230 = int_to_ptr.vmem [resolvable:$true] %s229
      %232 = dma.vmem_to_hbm [thread:$0]  %s230, 16, %s4, [#allocation4]
    $region21: #{tpu_custom_call.1} parent=1 // pred_fallthru
      _
    // Predicated region
    $region22: #{tpu_custom_call.1} parent=1 // pred_check
      _
    $region23: #{tpu_custom_call.1} parent=1 // pred_check_branch
      %234 = sbr.rel (0) target = $region25
    $region24: #{tpu_custom_call.1} parent=1 // pred_region
      %235 = dma.done [#allocation4], 16
    $region25: #{tpu_custom_call.1} parent=1 // pred_fallthru
      _
    %236 = vsyncpa [#allocation4], 1

</llo_original>
